<compile_context>
chip_gen: v6e
topology: v6e:2x2x1
jax: 0.10.0
libtpu: 0.0.40
codegen_flags: <defaults>
</compile_context>

<pallas_src>
import functools

import jax
import jax.numpy as jnp
from jax.experimental import pallas as pl
from jax.experimental.pallas import tpu as pltpu


# --------------------------------------------------------------------------- #
# Kernel
# --------------------------------------------------------------------------- #
def _cgif_kernel(x_ref, y_ref, a1_ref, a2_ref,
                 w1a_ref, b1a_ref, w1b_ref, b1b_ref,
                 w2a_ref, b2a_ref, w2b_ref, b2b_ref,
                 out_ref, *, seq_len):
    tm, d = x_ref.shape
    reps = tm // seq_len                       # tile rows per full sequence

    x = x_ref[...]                             # (tm, D)
    y = y_ref[...]                             # (tm, D)

    def filt(v, wa_ref, ba_ref, a_ref, wb_ref, bb_ref):
        # Linear1 (MXU, f32 accumulate)
        h = jnp.dot(v, wa_ref[...], preferred_element_type=jnp.float32) + ba_ref[...]
        # PReLU with per-seq-position slope; alpha is (S, D), tiled to (tm, D).
        alpha = jnp.tile(a_ref[...], (reps, 1))
        h = jnp.where(h > 0, h, alpha * h)
        # Linear2 (MXU)
        h = jnp.dot(h, wb_ref[...], preferred_element_type=jnp.float32) + bb_ref[...]
        return jax.nn.sigmoid(h)

    g1 = filt(x, w1a_ref, b1a_ref, a1_ref, w1b_ref, b1b_ref)
    g2 = filt(y, w2a_ref, b2a_ref, a2_ref, w2b_ref, b2b_ref)

    # out = [sigmoid(filter1(x)) * y | sigmoid(filter2(y)) * x]
    out_ref[:, :d] = (g1 * y).astype(out_ref.dtype)
    out_ref[:, d:] = (g2 * x).astype(out_ref.dtype)


# --------------------------------------------------------------------------- #
# One-time parameter preparation (hoisted out of the per-call path)
# --------------------------------------------------------------------------- #
def prepare_params(torch_params):
    """torch layout -> kernel layout.  Call once at init, not per forward."""
    (w1a, b1a, a1, w1b, b1b, w2a, b2a, a2, w2b, b2b) = torch_params
    d = w1a.shape[1]
    s = a1.shape[0]

    def lin(w, b):
        # torch nn.Linear: y = v @ W.T + b ; kernel wants (in, out) weights.
        return jnp.asarray(w).T, jnp.asarray(b).reshape(1, d)

    w1a_k, b1a_k = lin(w1a, b1a)
    w1b_k, b1b_k = lin(w1b, b1b)
    w2a_k, b2a_k = lin(w2a, b2a)
    w2b_k, b2b_k = lin(w2b, b2b)
    # PReLU slopes (S,) -> (S, D): tiny, resident in VMEM across all grid steps.
    a1_k = jnp.broadcast_to(jnp.asarray(a1).reshape(s, 1), (s, d))
    a2_k = jnp.broadcast_to(jnp.asarray(a2).reshape(s, 1), (s, d))
    return (w1a_k, b1a_k, a1_k, w1b_k, b1b_k, w2a_k, b2a_k, a2_k, w2b_k, b2b_k)


def _pick_tile_rows(batch, seq_len, target_rows=512):
    """Largest tile (multiple of S, divisor of B*S) with <= target_rows rows."""
    best = seq_len
    for b in range(1, batch + 1):
        if batch % b == 0 and b * seq_len <= max(target_rows, seq_len):
            best = b * seq_len
    return best


# --------------------------------------------------------------------------- #
# Wrapper
# --------------------------------------------------------------------------- #
def cross_gated_info_filter(x, y, kernel_params, *, target_rows=512):
    """x, y: (B, S, D).  kernel_params: output of prepare_params.  Returns (B, S, 2D)."""
    B, S, D = x.shape
    (w1a, b1a, a1, w1b, b1b, w2a, b2a, a2, w2b, b2b) = kernel_params
    M = B * S
    tm = _pick_tile_rows(B, S, target_rows)

    # Activation reshape only (contiguous -> free); no concats, no broadcasts.
    x2 = x.reshape(M, D)
    y2 = y.reshape(M, D)

    row_spec = pl.BlockSpec((tm, D), lambda i: (i, 0))         # tiled over M
    out_spec = pl.BlockSpec((tm, 2 * D), lambda i: (i, 0))
    const = lambda i: (0, 0)                                   # VMEM-resident params
    a_spec = pl.BlockSpec((S, D), const)
    w_spec = pl.BlockSpec((D, D), const)
    b_spec = pl.BlockSpec((1, D), const)

    kernel = functools.partial(_cgif_kernel, seq_len=S)

    out = pl.pallas_call(
        kernel,
        out_shape=jax.ShapeDtypeStruct((M, 2 * D), x.dtype),
        grid_spec=pltpu.PrefetchScalarGridSpec(
            num_scalar_prefetch=0,
            grid=(M // tm,),
            in_specs=[row_spec, row_spec,          # x, y
                      a_spec, a_spec,              # alpha1, alpha2
                      w_spec, b_spec, w_spec, b_spec,   # filter1: W1, b1, W2, b2
                      w_spec, b_spec, w_spec, b_spec],  # filter2: W1, b1, W2, b2
            out_specs=out_spec,
        ),
        compiler_params=pltpu.CompilerParams(
            dimension_semantics=("parallel",),     # rows shard across TCs on v7x
        ),
    )(x2, y2, a1, a2, w1a, b1a, w1b, b1b, w2a, b2a, w2b, b2b)

    return out.reshape(B, S, 2 * D)


# --------------------------------------------------------------------------- #
# Pure-JAX reference (torch-layout params) and demo
# --------------------------------------------------------------------------- #
def _reference(x, y, torch_params):
    (w1a, b1a, a1, w1b, b1b, w2a, b2a, a2, w2b, b2b) = torch_params

    def filt(v, wa, ba, alpha, wb, bb):
        h = v @ wa.T + ba                               # (B, S, D)
        h = jnp.where(h > 0, h, alpha[None, :, None] * h)
        h = h @ wb.T + bb
        return jax.nn.sigmoid(h)

    z1 = filt(x, w1a, b1a, a1, w1b, b1b) * y
    z2 = filt(y, w2a, b2a, a2, w2b, b2b) * x
    return jnp.concatenate([z1, z2], axis=-1)


def _init_torch_params(key, S, D):
    """Parameters in torch layout: Linear weight (out,in), bias (out,), PReLU (S,)."""
    ks = jax.random.split(key, 8)
    scale = 1.0 / jnp.sqrt(D)
    u = lambda k, shp: jax.random.uniform(k, shp, jnp.float32, -scale, scale)
    w1a, b1a = u(ks[0], (D, D)), u(ks[1], (D,))
    w1b, b1b = u(ks[2], (D, D)), u(ks[3], (D,))
    w2a, b2a = u(ks[4], (D, D)), u(ks[5], (D,))
    w2b, b2b = u(ks[6], (D, D)), u(ks[7], (D,))
    a1 = jnp.full((S,), 0.25, jnp.float32)              # PReLU default init
    a2 = jnp.full((S,), 0.25, jnp.float32)
    return (w1a, b1a, a1, w1b, b1b, w2a, b2a, a2, w2b, b2b)


if __name__ == "__main__":
    B, S, D = 2, 8, 32          # batch, FLOW_PAD_TRUNC_LENGTH, in_size
    key = jax.random.PRNGKey(0)
    kx, ky, kp = jax.random.split(key, 3)

    x = jax.random.normal(kx, (B, S, D), jnp.float32)
    y = jax.random.normal(ky, (B, S, D), jnp.float32)

    torch_params = _init_torch_params(kp, S, D)
    kernel_params = prepare_params(torch_params)        # one-time packing

    out = cross_gated_info_filter(x, y, kernel_params)
    out = jax.block_until_ready(out)

    ref = _reference(x, y, torch_params)
    assert out.shape == (B, S, 2 * D)
    assert jnp.allclose(out, ref, atol=1e-5, rtol=1e-5)

    print("KERNEL_OK")
</pallas_src>

<mosaic_0001>
module attributes {stable_mosaic.version = 11 : i64} {
  func.func @_cgif_kernel(%arg0: i32, %arg1: memref<16x32xf32, #tpu.memory_space<vmem>>, %arg2: memref<16x32xf32, #tpu.memory_space<vmem>>, %arg3: memref<8x32xf32, #tpu.memory_space<vmem>>, %arg4: memref<8x32xf32, #tpu.memory_space<vmem>>, %arg5: memref<32x32xf32, #tpu.memory_space<vmem>>, %arg6: memref<1x32xf32, #tpu.memory_space<vmem>>, %arg7: memref<32x32xf32, #tpu.memory_space<vmem>>, %arg8: memref<1x32xf32, #tpu.memory_space<vmem>>, %arg9: memref<32x32xf32, #tpu.memory_space<vmem>>, %arg10: memref<1x32xf32, #tpu.memory_space<vmem>>, %arg11: memref<32x32xf32, #tpu.memory_space<vmem>>, %arg12: memref<1x32xf32, #tpu.memory_space<vmem>>, %arg13: memref<16x64xf32, #tpu.memory_space<vmem>>) attributes {dimension_semantics = [#tpu.dimension_semantics<parallel>], iteration_bounds = array<i64: 1>, scalar_prefetch = 0 : i64, scratch_operands = 0 : i64, tpu.core_type = #tpu.core_type<tc>, window_params = [{transform_indices = @transform_0, window_bounds = array<i64: 16, 32>}, {transform_indices = @transform_1, window_bounds = array<i64: 16, 32>}, {pipeline_mode = #tpu.pipeline_mode<synchronous>, transform_indices = @transform_2, window_bounds = array<i64: 8, 32>}, {pipeline_mode = #tpu.pipeline_mode<synchronous>, transform_indices = @transform_3, window_bounds = array<i64: 8, 32>}, {pipeline_mode = #tpu.pipeline_mode<synchronous>, transform_indices = @transform_4, window_bounds = array<i64: 32, 32>}, {pipeline_mode = #tpu.pipeline_mode<synchronous>, transform_indices = @transform_5, window_bounds = array<i64: 1, 32>}, {pipeline_mode = #tpu.pipeline_mode<synchronous>, transform_indices = @transform_6, window_bounds = array<i64: 32, 32>}, {pipeline_mode = #tpu.pipeline_mode<synchronous>, transform_indices = @transform_7, window_bounds = array<i64: 1, 32>}, {pipeline_mode = #tpu.pipeline_mode<synchronous>, transform_indices = @transform_8, window_bounds = array<i64: 32, 32>}, {pipeline_mode = #tpu.pipeline_mode<synchronous>, transform_indices = @transform_9, window_bounds = array<i64: 1, 32>}, {pipeline_mode = #tpu.pipeline_mode<synchronous>, transform_indices = @transform_10, window_bounds = array<i64: 32, 32>}, {pipeline_mode = #tpu.pipeline_mode<synchronous>, transform_indices = @transform_11, window_bounds = array<i64: 1, 32>}, {transform_indices = @transform_12, window_bounds = array<i64: 16, 64>}]} {
    %c0 = arith.constant 0 : index
    %c0_0 = arith.constant 0 : index
    %0 = vector.load %arg1[%c0, %c0_0] : memref<16x32xf32, #tpu.memory_space<vmem>>, vector<16x32xf32>
    %c0_1 = arith.constant 0 : index
    %c0_2 = arith.constant 0 : index
    %1 = vector.load %arg2[%c0_1, %c0_2] : memref<16x32xf32, #tpu.memory_space<vmem>>, vector<16x32xf32>
    %c0_3 = arith.constant 0 : index
    %c0_4 = arith.constant 0 : index
    %2 = vector.load %arg5[%c0_3, %c0_4] : memref<32x32xf32, #tpu.memory_space<vmem>>, vector<32x32xf32>
    %cst = arith.constant dense<0.000000e+00> : vector<16x32xf32>
    %3 = tpu.matmul %0, %2, %cst {dimension_numbers = #tpu.dot_dimension_numbers<[1], [0], [0], [1], [0, 0, 1, 1], [], []>} : vector<16x32xf32>, vector<32x32xf32>, vector<16x32xf32> -> vector<16x32xf32>
    %c0_5 = arith.constant 0 : index
    %c0_6 = arith.constant 0 : index
    %4 = vector.load %arg6[%c0_5, %c0_6] : memref<1x32xf32, #tpu.memory_space<vmem>>, vector<1x32xf32>
    %5 = vector.broadcast %4 : vector<1x32xf32> to vector<16x32xf32>
    %6 = arith.addf %3, %5 : vector<16x32xf32>
    %c0_7 = arith.constant 0 : index
    %c0_8 = arith.constant 0 : index
    %7 = vector.load %arg3[%c0_7, %c0_8] : memref<8x32xf32, #tpu.memory_space<vmem>>, vector<8x32xf32>
    %8 = tpu.concatenate %7, %7 in 0 : vector<8x32xf32>, vector<8x32xf32> -> vector<16x32xf32>
    %cst_9 = arith.constant 0.000000e+00 : f32
    %9 = vector.broadcast %cst_9 : f32 to vector<16x32xf32>
    %10 = arith.cmpf ogt, %6, %9 : vector<16x32xf32>
    %11 = arith.mulf %8, %6 : vector<16x32xf32>
    %12 = arith.select %10, %6, %11 : vector<16x32xi1>, vector<16x32xf32>
    %c0_10 = arith.constant 0 : index
    %c0_11 = arith.constant 0 : index
    %13 = vector.load %arg7[%c0_10, %c0_11] : memref<32x32xf32, #tpu.memory_space<vmem>>, vector<32x32xf32>
    %cst_12 = arith.constant dense<0.000000e+00> : vector<16x32xf32>
    %14 = tpu.matmul %12, %13, %cst_12 {dimension_numbers = #tpu.dot_dimension_numbers<[1], [0], [0], [1], [0, 0, 1, 1], [], []>} : vector<16x32xf32>, vector<32x32xf32>, vector<16x32xf32> -> vector<16x32xf32>
    %c0_13 = arith.constant 0 : index
    %c0_14 = arith.constant 0 : index
    %15 = vector.load %arg8[%c0_13, %c0_14] : memref<1x32xf32, #tpu.memory_space<vmem>>, vector<1x32xf32>
    %16 = vector.broadcast %15 : vector<1x32xf32> to vector<16x32xf32>
    %17 = arith.addf %14, %16 : vector<16x32xf32>
    %18 = arith.negf %17 : vector<16x32xf32>
    %19 = math.exp %18 : vector<16x32xf32>
    %cst_15 = arith.constant 1.000000e+00 : f32
    %20 = vector.broadcast %cst_15 : f32 to vector<16x32xf32>
    %21 = arith.addf %20, %19 : vector<16x32xf32>
    %22 = arith.divf %20, %21 : vector<16x32xf32>
    %c0_16 = arith.constant 0 : index
    %c0_17 = arith.constant 0 : index
    %23 = vector.load %arg9[%c0_16, %c0_17] : memref<32x32xf32, #tpu.memory_space<vmem>>, vector<32x32xf32>
    %cst_18 = arith.constant dense<0.000000e+00> : vector<16x32xf32>
    %24 = tpu.matmul %1, %23, %cst_18 {dimension_numbers = #tpu.dot_dimension_numbers<[1], [0], [0], [1], [0, 0, 1, 1], [], []>} : vector<16x32xf32>, vector<32x32xf32>, vector<16x32xf32> -> vector<16x32xf32>
    %c0_19 = arith.constant 0 : index
    %c0_20 = arith.constant 0 : index
    %25 = vector.load %arg10[%c0_19, %c0_20] : memref<1x32xf32, #tpu.memory_space<vmem>>, vector<1x32xf32>
    %26 = vector.broadcast %25 : vector<1x32xf32> to vector<16x32xf32>
    %27 = arith.addf %24, %26 : vector<16x32xf32>
    %c0_21 = arith.constant 0 : index
    %c0_22 = arith.constant 0 : index
    %28 = vector.load %arg4[%c0_21, %c0_22] : memref<8x32xf32, #tpu.memory_space<vmem>>, vector<8x32xf32>
    %29 = tpu.concatenate %28, %28 in 0 : vector<8x32xf32>, vector<8x32xf32> -> vector<16x32xf32>
    %cst_23 = arith.constant 0.000000e+00 : f32
    %30 = vector.broadcast %cst_23 : f32 to vector<16x32xf32>
    %31 = arith.cmpf ogt, %27, %30 : vector<16x32xf32>
    %32 = arith.mulf %29, %27 : vector<16x32xf32>
    %33 = arith.select %31, %27, %32 : vector<16x32xi1>, vector<16x32xf32>
    %c0_24 = arith.constant 0 : index
    %c0_25 = arith.constant 0 : index
    %34 = vector.load %arg11[%c0_24, %c0_25] : memref<32x32xf32, #tpu.memory_space<vmem>>, vector<32x32xf32>
    %cst_26 = arith.constant dense<0.000000e+00> : vector<16x32xf32>
    %35 = tpu.matmul %33, %34, %cst_26 {dimension_numbers = #tpu.dot_dimension_numbers<[1], [0], [0], [1], [0, 0, 1, 1], [], []>} : vector<16x32xf32>, vector<32x32xf32>, vector<16x32xf32> -> vector<16x32xf32>
    %c0_27 = arith.constant 0 : index
    %c0_28 = arith.constant 0 : index
    %36 = vector.load %arg12[%c0_27, %c0_28] : memref<1x32xf32, #tpu.memory_space<vmem>>, vector<1x32xf32>
    %37 = vector.broadcast %36 : vector<1x32xf32> to vector<16x32xf32>
    %38 = arith.addf %35, %37 : vector<16x32xf32>
    %39 = arith.negf %38 : vector<16x32xf32>
    %40 = math.exp %39 : vector<16x32xf32>
    %cst_29 = arith.constant 1.000000e+00 : f32
    %41 = vector.broadcast %cst_29 : f32 to vector<16x32xf32>
    %42 = arith.addf %41, %40 : vector<16x32xf32>
    %43 = arith.divf %41, %42 : vector<16x32xf32>
    %44 = arith.mulf %22, %1 : vector<16x32xf32>
    %c0_30 = arith.constant 0 : index
    %c0_31 = arith.constant 0 : index
    %45 = vector.load %arg13[%c0_30, %c0_31] : memref<16x64xf32, #tpu.memory_space<vmem>>, vector<16x32xf32>
    tpu.vector_store %arg13[%c0_30, %c0_31], %44 {strides = array<i32>} : memref<16x64xf32, #tpu.memory_space<vmem>>, vector<16x32xf32>,
    %46 = arith.mulf %43, %0 : vector<16x32xf32>
    %c0_32 = arith.constant 0 : index
    %c32 = arith.constant 32 : index
    %47 = vector.load %arg13[%c0_32, %c32] : memref<16x64xf32, #tpu.memory_space<vmem>>, vector<16x32xf32>
    tpu.vector_store %arg13[%c0_32, %c32], %46 {strides = array<i32>} : memref<16x64xf32, #tpu.memory_space<vmem>>, vector<16x32xf32>,
    return
  }
  func.func @transform_0(%arg0: i32) -> (i32, i32) {
    %c0_i32 = arith.constant 0 : i32
    %c0_i32_0 = arith.constant 0 : i32
    return %arg0, %c0_i32 : i32, i32
  }
  func.func @transform_1(%arg0: i32) -> (i32, i32) {
    %c0_i32 = arith.constant 0 : i32
    %c0_i32_0 = arith.constant 0 : i32
    return %arg0, %c0_i32 : i32, i32
  }
  func.func @transform_2(%arg0: i32) -> (i32, i32) {
    %c0_i32 = arith.constant 0 : i32
    %c0_i32_0 = arith.constant 0 : i32
    %c0_i32_1 = arith.constant 0 : i32
    return %c0_i32, %c0_i32_0 : i32, i32
  }
  func.func @transform_3(%arg0: i32) -> (i32, i32) {
    %c0_i32 = arith.constant 0 : i32
    %c0_i32_0 = arith.constant 0 : i32
    %c0_i32_1 = arith.constant 0 : i32
    return %c0_i32, %c0_i32_0 : i32, i32
  }
  func.func @transform_4(%arg0: i32) -> (i32, i32) {
    %c0_i32 = arith.constant 0 : i32
    %c0_i32_0 = arith.constant 0 : i32
    %c0_i32_1 = arith.constant 0 : i32
    return %c0_i32, %c0_i32_0 : i32, i32
  }
  func.func @transform_5(%arg0: i32) -> (i32, i32) {
    %c0_i32 = arith.constant 0 : i32
    %c0_i32_0 = arith.constant 0 : i32
    %c0_i32_1 = arith.constant 0 : i32
    return %c0_i32, %c0_i32_0 : i32, i32
  }
  func.func @transform_6(%arg0: i32) -> (i32, i32) {
    %c0_i32 = arith.constant 0 : i32
    %c0_i32_0 = arith.constant 0 : i32
    %c0_i32_1 = arith.constant 0 : i32
    return %c0_i32, %c0_i32_0 : i32, i32
  }
  func.func @transform_7(%arg0: i32) -> (i32, i32) {
    %c0_i32 = arith.constant 0 : i32
    %c0_i32_0 = arith.constant 0 : i32
    %c0_i32_1 = arith.constant 0 : i32
    return %c0_i32, %c0_i32_0 : i32, i32
  }
  func.func @transform_8(%arg0: i32) -> (i32, i32) {
    %c0_i32 = arith.constant 0 : i32
    %c0_i32_0 = arith.constant 0 : i32
    %c0_i32_1 = arith.constant 0 : i32
    return %c0_i32, %c0_i32_0 : i32, i32
  }
  func.func @transform_9(%arg0: i32) -> (i32, i32) {
    %c0_i32 = arith.constant 0 : i32
    %c0_i32_0 = arith.constant 0 : i32
    %c0_i32_1 = arith.constant 0 : i32
    return %c0_i32, %c0_i32_0 : i32, i32
  }
  func.func @transform_10(%arg0: i32) -> (i32, i32) {
    %c0_i32 = arith.constant 0 : i32
    %c0_i32_0 = arith.constant 0 : i32
    %c0_i32_1 = arith.constant 0 : i32
    return %c0_i32, %c0_i32_0 : i32, i32
  }
  func.func @transform_11(%arg0: i32) -> (i32, i32) {
    %c0_i32 = arith.constant 0 : i32
    %c0_i32_0 = arith.constant 0 : i32
    %c0_i32_1 = arith.constant 0 : i32
    return %c0_i32, %c0_i32_0 : i32, i32
  }
  func.func @transform_12(%arg0: i32) -> (i32, i32) {
    %c0_i32 = arith.constant 0 : i32
    %c0_i32_0 = arith.constant 0 : i32
    return %arg0, %c0_i32 : i32, i32
  }
}

</mosaic_0001>

<llo_original>
// kernel: tpu_custom_call.1
$region0: #{tpu_custom_call.1}
  #allocation0 [shape = 'u32[]', space=smem, size = 0x4, offset = 0x4, fixed_abs, tag = 'smem constant byte address 0x4 - core index']
  #allocation1 [shape = 'u32[144,128]{1,0:T(1,128)}', space=vmem, size = 0x12000, scoped, tag = 'internal scratch']
  %s0 = inlined_call_operand.hbm [shape: f32[16,32], index: 0, kind: input, shape index: {}]
  %s1 = inlined_call_operand.hbm [shape: f32[16,32], index: 1, kind: input, shape index: {}]
  %s2 = inlined_call_operand.hbm [shape: f32[8,32], index: 2, kind: input, shape index: {}]
  %s3 = inlined_call_operand.hbm [shape: f32[8,32], index: 3, kind: input, shape index: {}]
  %s4 = inlined_call_operand.hbm [shape: f32[32,32], index: 4, kind: input, shape index: {}]
  %s5 = inlined_call_operand.vmem [shape: f32[1,32], index: 5, kind: input, shape index: {}]
  %s6 = inlined_call_operand.hbm [shape: f32[32,32], index: 6, kind: input, shape index: {}]
  %s7 = inlined_call_operand.vmem [shape: f32[1,32], index: 7, kind: input, shape index: {}]
  %s8 = inlined_call_operand.hbm [shape: f32[32,32], index: 8, kind: input, shape index: {}]
  %s9 = inlined_call_operand.vmem [shape: f32[1,32], index: 9, kind: input, shape index: {}]
  %s10 = inlined_call_operand.hbm [shape: f32[32,32], index: 10, kind: input, shape index: {}]
  %s11 = inlined_call_operand.vmem [shape: f32[1,32], index: 11, kind: input, shape index: {}]
  %s12 = inlined_call_operand.hbm [shape: f32[16,64], index: 12, kind: output, shape index: {}]
  %s13 = sld [smem:[#allocation0]]
  $region90: #{tpu_custom_call.1} parent=0
    _
  %s15 = ssub.s32 1, %s13
  %s16 = scalar_select 0, %s15, %s13
  $region1: #{tpu_custom_call.1} parent=0
    #allocation2 [shape = 'u8[8192]{0}', space=vmem, size = 0x2000, scoped, tag = 'input window, operand 0, single buffered']
    #allocation3 [shape = 's32[1]{0}', space=sflag, size = 0x4, scoped, tag = 'scoped memory for tpu_custom_call.1']
    #allocation4 [shape = 's32[1]{0}', space=sflag, size = 0x4, scoped, tag = 'scoped memory for tpu_custom_call.1']
    #allocation5 [shape = 'u8[8192]{0}', space=vmem, size = 0x2000, scoped, tag = 'input window, operand 1, single buffered']
    #allocation6 [shape = 's32[1]{0}', space=sflag, size = 0x4, scoped, tag = 'scoped memory for tpu_custom_call.1']
    #allocation7 [shape = 'u8[4096]{0}', space=vmem, size = 0x1000, scoped, tag = 'input window, operand 2, single buffered']
    #allocation8 [shape = 'u8[4096]{0}', space=vmem, size = 0x1000, scoped, tag = 'input window, operand 3, single buffered']
    #allocation9 [shape = 's32[1]{0}', space=sflag, size = 0x4, scoped, tag = 'scoped memory for tpu_custom_call.1']
    #allocation10 [shape = 'u8[16384]{0}', space=vmem, size = 0x4000, scoped, tag = 'input window, operand 4, single buffered']
    #allocation11 [shape = 'u8[16384]{0}', space=vmem, size = 0x4000, scoped, tag = 'input window, operand 6, single buffered']
    #allocation12 [shape = 's32[1]{0}', space=sflag, size = 0x4, scoped, tag = 'scoped memory for tpu_custom_call.1']
    #allocation13 [shape = 'u8[16384]{0}', space=vmem, size = 0x4000, scoped, tag = 'input window, operand 8, single buffered']
    #allocation14 [shape = 'u8[16384]{0}', space=vmem, size = 0x4000, scoped, tag = 'input window, operand 10, single buffered']
    #allocation15 [shape = 's32[1]{0}', space=sflag, size = 0x4, scoped, tag = 'scoped memory for tpu_custom_call.1']
    #allocation16 [shape = 'u8[8192]{0}', space=vmem, size = 0x2000, scoped, tag = 'output window, operand 0, single buffered']
    %17 = vsyncpa [#allocation3], 0
    %18 = vsyncpa [#allocation6], 0
    %19 = vsyncpa [#allocation9], 0
    %20 = vsyncpa [#allocation12], 0
    %21 = vsyncpa [#allocation15], 0
    %22 = vsyncpa [#allocation4], 0
    // Predicated region
    $region2: #{tpu_custom_call.1} parent=1 // pred_check
      _
    $region3: #{tpu_custom_call.1} parent=1 // pred_check_branch
      %24 = sbr.rel (0) target = $region5
    $region4: #{tpu_custom_call.1} parent=1 // pred_region
      %s26 = ssub.s32 256, 256
      %27 = vsyncadd [#allocation3], %s26
      %s28 = sshll.u32 [#allocation2], 4
      %s29 = int_to_ptr.vmem [resolvable:$true] %s28
      %34 = dma.hbm_to_vmem [thread:$0]  %s0, 256, %s29, [#allocation3], 128, 128, 8
    $region5: #{tpu_custom_call.1} parent=1 // pred_fallthru
      _
    // Predicated region
    $region6: #{tpu_custom_call.1} parent=1 // pred_check
      _
    $region7: #{tpu_custom_call.1} parent=1 // pred_check_branch
      %36 = sbr.rel (0) target = $region9
    $region8: #{tpu_custom_call.1} parent=1 // pred_region
      %s38 = ssub.s32 256, 256
      %39 = vsyncadd [#allocation6], %s38
      %s40 = sshll.u32 [#allocation5], 4
      %s41 = int_to_ptr.vmem [resolvable:$true] %s40
      %46 = dma.hbm_to_vmem [thread:$0]  %s1, 256, %s41, [#allocation6], 128, 128, 8
    $region9: #{tpu_custom_call.1} parent=1 // pred_fallthru
      _
    // Predicated region
    $region10: #{tpu_custom_call.1} parent=1 // pred_check
      _
    $region11: #{tpu_custom_call.1} parent=1 // pred_check_branch
      %48 = sbr.rel (0) target = $region13
    $region12: #{tpu_custom_call.1} parent=1 // pred_region
      %s50 = ssub.s32 128, 128
      %51 = vsyncadd [#allocation6], %s50
      %s53 = sshll.u32 [#allocation7], 4
      %s54 = int_to_ptr.vmem [resolvable:$true] %s53
      %56 = dma.hbm_to_vmem [thread:$0]  %s2, 128, %s54, [#allocation6]
    $region13: #{tpu_custom_call.1} parent=1 // pred_fallthru
      _
    // Predicated region
    $region14: #{tpu_custom_call.1} parent=1 // pred_check
      _
    $region15: #{tpu_custom_call.1} parent=1 // pred_check_branch
      %58 = sbr.rel (0) target = $region17
    $region16: #{tpu_custom_call.1} parent=1 // pred_region
      %s60 = ssub.s32 128, 128
      %61 = vsyncadd [#allocation9], %s60
      %s63 = sshll.u32 [#allocation8], 4
      %s64 = int_to_ptr.vmem [resolvable:$true] %s63
      %66 = dma.hbm_to_vmem [thread:$0]  %s3, 128, %s64, [#allocation9]
    $region17: #{tpu_custom_call.1} parent=1 // pred_fallthru
      _
    // Predicated region
    $region18: #{tpu_custom_call.1} parent=1 // pred_check
      _
    $region19: #{tpu_custom_call.1} parent=1 // pred_check_branch
      %68 = sbr.rel (0) target = $region21
    $region20: #{tpu_custom_call.1} parent=1 // pred_region
      %s70 = ssub.s32 512, 512
      %71 = vsyncadd [#allocation9], %s70
      %s72 = sshll.u32 [#allocation10], 4
      %s73 = int_to_ptr.vmem [resolvable:$true] %s72
      %78 = dma.hbm_to_vmem [thread:$0]  %s4, 512, %s73, [#allocation9], 128, 128, 8
    $region21: #{tpu_custom_call.1} parent=1 // pred_fallthru
      _
    // Predicated region
    $region22: #{tpu_custom_call.1} parent=1 // pred_check
      _
    $region23: #{tpu_custom_call.1} parent=1 // pred_check_branch
      %80 = sbr.rel (0) target = $region25
    $region24: #{tpu_custom_call.1} parent=1 // pred_region
      _
    $region25: #{tpu_custom_call.1} parent=1 // pred_fallthru
      _
    // Predicated region
    $region26: #{tpu_custom_call.1} parent=1 // pred_check
      _
    $region27: #{tpu_custom_call.1} parent=1 // pred_check_branch
      %82 = sbr.rel (0) target = $region29
    $region28: #{tpu_custom_call.1} parent=1 // pred_region
      %s84 = ssub.s32 512, 512
      %85 = vsyncadd [#allocation12], %s84
      %s86 = sshll.u32 [#allocation11], 4
      %s87 = int_to_ptr.vmem [resolvable:$true] %s86
      %92 = dma.hbm_to_vmem [thread:$0]  %s6, 512, %s87, [#allocation12], 128, 128, 8
    $region29: #{tpu_custom_call.1} parent=1 // pred_fallthru
      _
    // Predicated region
    $region30: #{tpu_custom_call.1} parent=1 // pred_check
      _
    $region31: #{tpu_custom_call.1} parent=1 // pred_check_branch
      %94 = sbr.rel (0) target = $region33
    $region32: #{tpu_custom_call.1} parent=1 // pred_region
      _
    $region33: #{tpu_custom_call.1} parent=1 // pred_fallthru
      _
    // Predicated region
    $region34: #{tpu_custom_call.1} parent=1 // pred_check
      _
    $region35: #{tpu_custom_call.1} parent=1 // pred_check_branch
      %96 = sbr.rel (0) target = $region37
    $region36: #{tpu_custom_call.1} parent=1 // pred_region
      %s98 = ssub.s32 512, 512
      %99 = vsyncadd [#allocation12], %s98
      %s100 = sshll.u32 [#allocation13], 4
      %s101 = int_to_ptr.vmem [resolvable:$true] %s100
      %106 = dma.hbm_to_vmem [thread:$0]  %s8, 512, %s101, [#allocation12], 128, 128, 8
    $region37: #{tpu_custom_call.1} parent=1 // pred_fallthru
      _
    // Predicated region
    $region38: #{tpu_custom_call.1} parent=1 // pred_check
      _
    $region39: #{tpu_custom_call.1} parent=1 // pred_check_branch
      %108 = sbr.rel (0) target = $region41
    $region40: #{tpu_custom_call.1} parent=1 // pred_region
      _
    $region41: #{tpu_custom_call.1} parent=1 // pred_fallthru
      _
    // Predicated region
    $region42: #{tpu_custom_call.1} parent=1 // pred_check
      _
    $region43: #{tpu_custom_call.1} parent=1 // pred_check_branch
      %110 = sbr.rel (0) target = $region45
    $region44: #{tpu_custom_call.1} parent=1 // pred_region
      %s112 = ssub.s32 512, 512
      %113 = vsyncadd [#allocation15], %s112
      %s114 = sshll.u32 [#allocation14], 4
      %s115 = int_to_ptr.vmem [resolvable:$true] %s114
      %120 = dma.hbm_to_vmem [thread:$0]  %s10, 512, %s115, [#allocation15], 128, 128, 8
    $region45: #{tpu_custom_call.1} parent=1 // pred_fallthru
      _
    // Predicated region
    $region46: #{tpu_custom_call.1} parent=1 // pred_check
      _
    $region47: #{tpu_custom_call.1} parent=1 // pred_check_branch
      %122 = sbr.rel (0) target = $region49
    $region48: #{tpu_custom_call.1} parent=1 // pred_region
      _
    $region49: #{tpu_custom_call.1} parent=1 // pred_fallthru
      _
    // Predicated region
    $region50: #{tpu_custom_call.1} parent=1 // pred_check
      _
    $region51: #{tpu_custom_call.1} parent=1 // pred_check_branch
      %124 = sbr.rel (0) target = $region53
    $region52: #{tpu_custom_call.1} parent=1 // pred_region
      %125 = dma.done [#allocation3], 256
    $region53: #{tpu_custom_call.1} parent=1 // pred_fallthru
      _
    // Predicated region
    $region54: #{tpu_custom_call.1} parent=1 // pred_check
      _
    $region55: #{tpu_custom_call.1} parent=1 // pred_check_branch
      %127 = sbr.rel (0) target = $region57
    $region56: #{tpu_custom_call.1} parent=1 // pred_region
      %128 = dma.done [#allocation6], 256
    $region57: #{tpu_custom_call.1} parent=1 // pred_fallthru
      _
    // Predicated region
    $region58: #{tpu_custom_call.1} parent=1 // pred_check
      _
    $region59: #{tpu_custom_call.1} parent=1 // pred_check_branch
      %130 = sbr.rel (0) target = $region61
    $region60: #{tpu_custom_call.1} parent=1 // pred_region
      %131 = dma.done [#allocation6], 128
    $region61: #{tpu_custom_call.1} parent=1 // pred_fallthru
      _
    // Predicated region
    $region62: #{tpu_custom_call.1} parent=1 // pred_check
      _
    $region63: #{tpu_custom_call.1} parent=1 // pred_check_branch
      %133 = sbr.rel (0) target = $region65
    $region64: #{tpu_custom_call.1} parent=1 // pred_region
      %134 = dma.done [#allocation9], 128
    $region65: #{tpu_custom_call.1} parent=1 // pred_fallthru
      _
    // Predicated region
    $region66: #{tpu_custom_call.1} parent=1 // pred_check
      _
    $region67: #{tpu_custom_call.1} parent=1 // pred_check_branch
      %136 = sbr.rel (0) target = $region69
    $region68: #{tpu_custom_call.1} parent=1 // pred_region
      %137 = dma.done [#allocation9], 512
    $region69: #{tpu_custom_call.1} parent=1 // pred_fallthru
      _
    // Predicated region
    $region70: #{tpu_custom_call.1} parent=1 // pred_check
      _
    $region71: #{tpu_custom_call.1} parent=1 // pred_check_branch
      %139 = sbr.rel (0) target = $region73
    $region72: #{tpu_custom_call.1} parent=1 // pred_region
      %140 = dma.done [#allocation12], 512
    $region73: #{tpu_custom_call.1} parent=1 // pred_fallthru
      _
    // Predicated region
    $region74: #{tpu_custom_call.1} parent=1 // pred_check
      _
    $region75: #{tpu_custom_call.1} parent=1 // pred_check_branch
      %142 = sbr.rel (0) target = $region77
    $region76: #{tpu_custom_call.1} parent=1 // pred_region
      %143 = dma.done [#allocation12], 512
    $region77: #{tpu_custom_call.1} parent=1 // pred_fallthru
      _
    // Predicated region
    $region78: #{tpu_custom_call.1} parent=1 // pred_check
      _
    $region79: #{tpu_custom_call.1} parent=1 // pred_check_branch
      %145 = sbr.rel (0) target = $region81
    $region80: #{tpu_custom_call.1} parent=1 // pred_region
      %146 = dma.done [#allocation15], 512
    $region81: #{tpu_custom_call.1} parent=1 // pred_fallthru
      _
    %v147 = vld [vmem:[#allocation2] sm:$0xff]
    %v148 = vld [vmem:[#allocation2 + $0x8] sm:$0xff]
    %v149 = vld [vmem:[#allocation5] sm:$0xff]
    %v150 = vld [vmem:[#allocation5 + $0x8] sm:$0xff]
    %v151 = vld [vmem:[#allocation10] sm:$0xff]
    %v152 = vld [vmem:[#allocation10 + $0x8] sm:$0xff]
    %v153 = vld [vmem:[#allocation10 + $0x10] sm:$0xff]
    %v154 = vld [vmem:[#allocation10 + $0x18] sm:$0xff]
    %v155 = vld [vmem:[%s5] sm:$0x1]
    %v157 = vlaneseq
    %v158 = vshrl.u32 %v157, 7
    %v159 = vsub.s32 0, %v158
    %v160 = vrot.slane %v155, %v159
    %vm162 = vcmask 261120
    %v164 = vsel %vm162, %v147, 0
    %v167 = vsel %vm162, %v148, 0
    %169 = vmatprep.subr.mxu0 0.0
    %170 = vmatpush1.msra.mxu0 0.0
    %171 = vmatprep.subr.mxu0 0.0
    %172 = vmatpush1.msra.mxu0 0.0
    %173 = vmatprep.subr.mxu0 0.0
    %174 = vmatpush1.msra.mxu0 0.0
    %175 = vmatprep.subr.mxu0 0.0
    %176 = vmatpush1.msra.mxu0 0.0
    %177 = vmatprep.subr.mxu0 0.0
    %178 = vmatpush1.msra.mxu0 0.0
    %179 = vmatprep.subr.mxu0 0.0
    %180 = vmatpush1.msra.mxu0 0.0
    %181 = vmatprep.subr.mxu0 0.0
    %182 = vmatpush1.msra.mxu0 0.0
    %183 = vmatprep.subr.mxu0 0.0
    %184 = vmatpush1.msra.mxu0 0.0
    %185 = vmatprep.subr.mxu0 0.0
    %186 = vmatpush1.msra.mxu0 0.0
    %187 = vmatprep.subr.mxu0 0.0
    %188 = vmatpush1.msra.mxu0 0.0
    %189 = vmatprep.subr.mxu0 0.0
    %190 = vmatpush1.msra.mxu0 0.0
    %191 = vmatprep.subr.mxu0 0.0
    %192 = vmatpush1.msra.mxu0 0.0
    %193 = vmatprep.subr.mxu0 0.0
    %194 = vmatpush1.msra.mxu0 %v154
    %195 = vmatprep.subr.mxu0 0.0
    %196 = vmatpush1.msra.mxu0 %v153
    %197 = vmatprep.subr.mxu0 0.0
    %198 = vmatpush1.msra.mxu0 %v152
    %199 = vmatprep.subr.mxu0 0.0
    %200 = vmatpush1.msra.mxu0 %v151
    %201 = vmatprep.subr.mxu0 0.0
    %202 = vmatpush2.msra.mxu0 0.0
    %203 = vmatprep.subr.mxu0 0.0
    %204 = vmatpush2.msra.mxu0 0.0
    %205 = vmatprep.subr.mxu0 0.0
    %206 = vmatpush2.msra.mxu0 0.0
    %207 = vmatprep.subr.mxu0 0.0
    %208 = vmatpush2.msra.mxu0 0.0
    %209 = vmatprep.subr.mxu0 0.0
    %210 = vmatpush2.msra.mxu0 0.0
    %211 = vmatprep.subr.mxu0 0.0
    %212 = vmatpush2.msra.mxu0 0.0
    %213 = vmatprep.subr.mxu0 0.0
    %214 = vmatpush2.msra.mxu0 0.0
    %215 = vmatprep.subr.mxu0 0.0
    %216 = vmatpush2.msra.mxu0 0.0
    %217 = vmatprep.subr.mxu0 0.0
    %218 = vmatpush2.msra.mxu0 0.0
    %219 = vmatprep.subr.mxu0 0.0
    %220 = vmatpush2.msra.mxu0 0.0
    %221 = vmatprep.subr.mxu0 0.0
    %222 = vmatpush2.msra.mxu0 0.0
    %223 = vmatprep.subr.mxu0 0.0
    %224 = vmatpush2.msra.mxu0 0.0
    %225 = vmatprep.subr.mxu0 0.0
    %226 = vmatpush2.msra.mxu0 0.0
    %227 = vmatprep.subr.mxu0 0.0
    %228 = vmatpush2.msra.mxu0 0.0
    %229 = vmatprep.subr.mxu0 0.0
    %230 = vmatpush2.msra.mxu0 0.0
    %231 = vmatprep.subr.mxu0 0.0
    %232 = vmatpush2.msra.mxu0 0.0
    %233 = vmatprep.mubr.f32.mxu0 0.0
    %234 = vmatmul.mubr.f32.gmra.mxu0 %v164
    %v235 = vpop.f32.mrf.mxu0
    %v236 = vadd.f32 %v160, %v235
    %v237 = vpop.f32.mrf.mxu0
    %238 = vmatprep.mubr.f32.mxu0 0.0
    %239 = vmatmul.mubr.f32.gmra.mxu0 %v167
    %v240 = vpop.f32.mrf.mxu0
    %v241 = vadd.f32 %v160, %v240
    %v242 = vpop.f32.mrf.mxu0
    %243 = vdwg.mxu0
    %v244 = vld [vmem:[#allocation7] sm:$0xff]
    %vm245 = vcmp.gt.f32.partialorder %v236, 0.0
    %vm246 = vcmp.gt.f32.partialorder %v241, 0.0
    %v247 = vmul.f32 %v244, %v236
    %v248 = vmul.f32 %v244, %v241
    %v249 = vsel %vm245, %v236, %v247
    %v250 = vsel %vm246, %v241, %v248
    %v251 = vld [vmem:[#allocation11] sm:$0xff]
    %v252 = vld [vmem:[#allocation11 + $0x8] sm:$0xff]
    %v253 = vld [vmem:[#allocation11 + $0x10] sm:$0xff]
    %v254 = vld [vmem:[#allocation11 + $0x18] sm:$0xff]
    %v255 = vld [vmem:[%s7] sm:$0x1]
    %v257 = vlaneseq
    %v258 = vshrl.u32 %v257, 7
    %v259 = vsub.s32 0, %v258
    %v260 = vrot.slane %v255, %v259
    %v263 = vsel %vm162, %v249, 0
    %v266 = vsel %vm162, %v250, 0
    %268 = vmatprep.subr.mxu0 0.0
    %269 = vmatpush1.msra.mxu0 0.0
    %270 = vmatprep.subr.mxu0 0.0
    %271 = vmatpush1.msra.mxu0 0.0
    %272 = vmatprep.subr.mxu0 0.0
    %273 = vmatpush1.msra.mxu0 0.0
    %274 = vmatprep.subr.mxu0 0.0
    %275 = vmatpush1.msra.mxu0 0.0
    %276 = vmatprep.subr.mxu0 0.0
    %277 = vmatpush1.msra.mxu0 0.0
    %278 = vmatprep.subr.mxu0 0.0
    %279 = vmatpush1.msra.mxu0 0.0
    %280 = vmatprep.subr.mxu0 0.0
    %281 = vmatpush1.msra.mxu0 0.0
    %282 = vmatprep.subr.mxu0 0.0
    %283 = vmatpush1.msra.mxu0 0.0
    %284 = vmatprep.subr.mxu0 0.0
    %285 = vmatpush1.msra.mxu0 0.0
    %286 = vmatprep.subr.mxu0 0.0
    %287 = vmatpush1.msra.mxu0 0.0
    %288 = vmatprep.subr.mxu0 0.0
    %289 = vmatpush1.msra.mxu0 0.0
    %290 = vmatprep.subr.mxu0 0.0
    %291 = vmatpush1.msra.mxu0 0.0
    %292 = vmatprep.subr.mxu0 0.0
    %293 = vmatpush1.msra.mxu0 %v254
    %294 = vmatprep.subr.mxu0 0.0
    %295 = vmatpush1.msra.mxu0 %v253
    %296 = vmatprep.subr.mxu0 0.0
    %297 = vmatpush1.msra.mxu0 %v252
    %298 = vmatprep.subr.mxu0 0.0
    %299 = vmatpush1.msra.mxu0 %v251
    %300 = vmatprep.subr.mxu0 0.0
    %301 = vmatpush2.msra.mxu0 0.0
    %302 = vmatprep.subr.mxu0 0.0
    %303 = vmatpush2.msra.mxu0 0.0
    %304 = vmatprep.subr.mxu0 0.0
    %305 = vmatpush2.msra.mxu0 0.0
    %306 = vmatprep.subr.mxu0 0.0
    %307 = vmatpush2.msra.mxu0 0.0
    %308 = vmatprep.subr.mxu0 0.0
    %309 = vmatpush2.msra.mxu0 0.0
    %310 = vmatprep.subr.mxu0 0.0
    %311 = vmatpush2.msra.mxu0 0.0
    %312 = vmatprep.subr.mxu0 0.0
    %313 = vmatpush2.msra.mxu0 0.0
    %314 = vmatprep.subr.mxu0 0.0
    %315 = vmatpush2.msra.mxu0 0.0
    %316 = vmatprep.subr.mxu0 0.0
    %317 = vmatpush2.msra.mxu0 0.0
    %318 = vmatprep.subr.mxu0 0.0
    %319 = vmatpush2.msra.mxu0 0.0
    %320 = vmatprep.subr.mxu0 0.0
    %321 = vmatpush2.msra.mxu0 0.0
    %322 = vmatprep.subr.mxu0 0.0
    %323 = vmatpush2.msra.mxu0 0.0
    %324 = vmatprep.subr.mxu0 0.0
    %325 = vmatpush2.msra.mxu0 0.0
    %326 = vmatprep.subr.mxu0 0.0
    %327 = vmatpush2.msra.mxu0 0.0
    %328 = vmatprep.subr.mxu0 0.0
    %329 = vmatpush2.msra.mxu0 0.0
    %330 = vmatprep.subr.mxu0 0.0
    %331 = vmatpush2.msra.mxu0 0.0
    %332 = vmatprep.mubr.f32.mxu0 0.0
    %333 = vmatmul.mubr.f32.gmra.mxu0 %v263
    %v334 = vpop.f32.mrf.mxu0
    %v335 = vadd.f32 %v260, %v334
    %v336 = vpop.f32.mrf.mxu0
    %337 = vmatprep.mubr.f32.mxu0 0.0
    %338 = vmatmul.mubr.f32.gmra.mxu0 %v266
    %v339 = vpop.f32.mrf.mxu0
    %v340 = vadd.f32 %v260, %v339
    %v341 = vpop.f32.mrf.mxu0
    %342 = vdwg.mxu0
    %v343 = vxor.u32 %v335, 2147483648
    %v344 = vxor.u32 %v340, 2147483648
    %v345 = vmul.f32 %v343, 1.442695
    %v346 = vpow.pop %v345
    %v347 = vmul.f32 %v344, 1.442695
    %v348 = vpow.pop %v347
    %v349 = vadd.f32 %v346, 1.0
    %v350 = vadd.f32 %v348, 1.0
    %v351 = vrcp.pop %v349
    %v352 = vmul.f32 1.0, %v351
    %v353 = vrcp.pop %v350
    %v354 = vmul.f32 1.0, %v353
    %v355 = vld [vmem:[#allocation13] sm:$0xff]
    %v356 = vld [vmem:[#allocation13 + $0x8] sm:$0xff]
    %v357 = vld [vmem:[#allocation13 + $0x10] sm:$0xff]
    %v358 = vld [vmem:[#allocation13 + $0x18] sm:$0xff]
    %v359 = vld [vmem:[%s9] sm:$0x1]
    %v361 = vlaneseq
    %v362 = vshrl.u32 %v361, 7
    %v363 = vsub.s32 0, %v362
    %v364 = vrot.slane %v359, %v363
    %v367 = vsel %vm162, %v149, 0
    %v370 = vsel %vm162, %v150, 0
    %372 = vmatprep.subr.mxu0 0.0
    %373 = vmatpush1.msra.mxu0 0.0
    %374 = vmatprep.subr.mxu0 0.0
    %375 = vmatpush1.msra.mxu0 0.0
    %376 = vmatprep.subr.mxu0 0.0
    %377 = vmatpush1.msra.mxu0 0.0
    %378 = vmatprep.subr.mxu0 0.0
    %379 = vmatpush1.msra.mxu0 0.0
    %380 = vmatprep.subr.mxu0 0.0
    %381 = vmatpush1.msra.mxu0 0.0
    %382 = vmatprep.subr.mxu0 0.0
    %383 = vmatpush1.msra.mxu0 0.0
    %384 = vmatprep.subr.mxu0 0.0
    %385 = vmatpush1.msra.mxu0 0.0
    %386 = vmatprep.subr.mxu0 0.0
    %387 = vmatpush1.msra.mxu0 0.0
    %388 = vmatprep.subr.mxu0 0.0
    %389 = vmatpush1.msra.mxu0 0.0
    %390 = vmatprep.subr.mxu0 0.0
    %391 = vmatpush1.msra.mxu0 0.0
    %392 = vmatprep.subr.mxu0 0.0
    %393 = vmatpush1.msra.mxu0 0.0
    %394 = vmatprep.subr.mxu0 0.0
    %395 = vmatpush1.msra.mxu0 0.0
    %396 = vmatprep.subr.mxu0 0.0
    %397 = vmatpush1.msra.mxu0 %v358
    %398 = vmatprep.subr.mxu0 0.0
    %399 = vmatpush1.msra.mxu0 %v357
    %400 = vmatprep.subr.mxu0 0.0
    %401 = vmatpush1.msra.mxu0 %v356
    %402 = vmatprep.subr.mxu0 0.0
    %403 = vmatpush1.msra.mxu0 %v355
    %404 = vmatprep.subr.mxu0 0.0
    %405 = vmatpush2.msra.mxu0 0.0
    %406 = vmatprep.subr.mxu0 0.0
    %407 = vmatpush2.msra.mxu0 0.0
    %408 = vmatprep.subr.mxu0 0.0
    %409 = vmatpush2.msra.mxu0 0.0
    %410 = vmatprep.subr.mxu0 0.0
    %411 = vmatpush2.msra.mxu0 0.0
    %412 = vmatprep.subr.mxu0 0.0
    %413 = vmatpush2.msra.mxu0 0.0
    %414 = vmatprep.subr.mxu0 0.0
    %415 = vmatpush2.msra.mxu0 0.0
    %416 = vmatprep.subr.mxu0 0.0
    %417 = vmatpush2.msra.mxu0 0.0
    %418 = vmatprep.subr.mxu0 0.0
    %419 = vmatpush2.msra.mxu0 0.0
    %420 = vmatprep.subr.mxu0 0.0
    %421 = vmatpush2.msra.mxu0 0.0
    %422 = vmatprep.subr.mxu0 0.0
    %423 = vmatpush2.msra.mxu0 0.0
    %424 = vmatprep.subr.mxu0 0.0
    %425 = vmatpush2.msra.mxu0 0.0
    %426 = vmatprep.subr.mxu0 0.0
    %427 = vmatpush2.msra.mxu0 0.0
    %428 = vmatprep.subr.mxu0 0.0
    %429 = vmatpush2.msra.mxu0 0.0
    %430 = vmatprep.subr.mxu0 0.0
    %431 = vmatpush2.msra.mxu0 0.0
    %432 = vmatprep.subr.mxu0 0.0
    %433 = vmatpush2.msra.mxu0 0.0
    %434 = vmatprep.subr.mxu0 0.0
    %435 = vmatpush2.msra.mxu0 0.0
    %436 = vmatprep.mubr.f32.mxu0 0.0
    %437 = vmatmul.mubr.f32.gmra.mxu0 %v367
    %v438 = vpop.f32.mrf.mxu0
    %v439 = vadd.f32 %v364, %v438
    %v440 = vpop.f32.mrf.mxu0
    %441 = vmatprep.mubr.f32.mxu0 0.0
    %442 = vmatmul.mubr.f32.gmra.mxu0 %v370
    %v443 = vpop.f32.mrf.mxu0
    %v444 = vadd.f32 %v364, %v443
    %v445 = vpop.f32.mrf.mxu0
    %446 = vdwg.mxu0
    %v447 = vld [vmem:[#allocation8] sm:$0xff]
    %vm448 = vcmp.gt.f32.partialorder %v439, 0.0
    %vm449 = vcmp.gt.f32.partialorder %v444, 0.0
    %v450 = vmul.f32 %v447, %v439
    %v451 = vmul.f32 %v447, %v444
    %v452 = vsel %vm448, %v439, %v450
    %v453 = vsel %vm449, %v444, %v451
    %v454 = vld [vmem:[#allocation14] sm:$0xff]
    %v455 = vld [vmem:[#allocation14 + $0x8] sm:$0xff]
    %v456 = vld [vmem:[#allocation14 + $0x10] sm:$0xff]
    %v457 = vld [vmem:[#allocation14 + $0x18] sm:$0xff]
    %v458 = vld [vmem:[%s11] sm:$0x1]
    %v460 = vlaneseq
    %v461 = vshrl.u32 %v460, 7
    %v462 = vsub.s32 0, %v461
    %v463 = vrot.slane %v458, %v462
    %v466 = vsel %vm162, %v452, 0
    %v469 = vsel %vm162, %v453, 0
    %471 = vmatprep.subr.mxu0 0.0
    %472 = vmatpush1.msra.mxu0 0.0
    %473 = vmatprep.subr.mxu0 0.0
    %474 = vmatpush1.msra.mxu0 0.0
    %475 = vmatprep.subr.mxu0 0.0
    %476 = vmatpush1.msra.mxu0 0.0
    %477 = vmatprep.subr.mxu0 0.0
    %478 = vmatpush1.msra.mxu0 0.0
    %479 = vmatprep.subr.mxu0 0.0
    %480 = vmatpush1.msra.mxu0 0.0
    %481 = vmatprep.subr.mxu0 0.0
    %482 = vmatpush1.msra.mxu0 0.0
    %483 = vmatprep.subr.mxu0 0.0
    %484 = vmatpush1.msra.mxu0 0.0
    %485 = vmatprep.subr.mxu0 0.0
    %486 = vmatpush1.msra.mxu0 0.0
    %487 = vmatprep.subr.mxu0 0.0
    %488 = vmatpush1.msra.mxu0 0.0
    %489 = vmatprep.subr.mxu0 0.0
    %490 = vmatpush1.msra.mxu0 0.0
    %491 = vmatprep.subr.mxu0 0.0
    %492 = vmatpush1.msra.mxu0 0.0
    %493 = vmatprep.subr.mxu0 0.0
    %494 = vmatpush1.msra.mxu0 0.0
    %495 = vmatprep.subr.mxu0 0.0
    %496 = vmatpush1.msra.mxu0 %v457
    %497 = vmatprep.subr.mxu0 0.0
    %498 = vmatpush1.msra.mxu0 %v456
    %499 = vmatprep.subr.mxu0 0.0
    %500 = vmatpush1.msra.mxu0 %v455
    %501 = vmatprep.subr.mxu0 0.0
    %502 = vmatpush1.msra.mxu0 %v454
    %503 = vmatprep.subr.mxu0 0.0
    %504 = vmatpush2.msra.mxu0 0.0
    %505 = vmatprep.subr.mxu0 0.0
    %506 = vmatpush2.msra.mxu0 0.0
    %507 = vmatprep.subr.mxu0 0.0
    %508 = vmatpush2.msra.mxu0 0.0
    %509 = vmatprep.subr.mxu0 0.0
    %510 = vmatpush2.msra.mxu0 0.0
    %511 = vmatprep.subr.mxu0 0.0
    %512 = vmatpush2.msra.mxu0 0.0
    %513 = vmatprep.subr.mxu0 0.0
    %514 = vmatpush2.msra.mxu0 0.0
    %515 = vmatprep.subr.mxu0 0.0
    %516 = vmatpush2.msra.mxu0 0.0
    %517 = vmatprep.subr.mxu0 0.0
    %518 = vmatpush2.msra.mxu0 0.0
    %519 = vmatprep.subr.mxu0 0.0
    %520 = vmatpush2.msra.mxu0 0.0
    %521 = vmatprep.subr.mxu0 0.0
    %522 = vmatpush2.msra.mxu0 0.0
    %523 = vmatprep.subr.mxu0 0.0
    %524 = vmatpush2.msra.mxu0 0.0
    %525 = vmatprep.subr.mxu0 0.0
    %526 = vmatpush2.msra.mxu0 0.0
    %527 = vmatprep.subr.mxu0 0.0
    %528 = vmatpush2.msra.mxu0 0.0
    %529 = vmatprep.subr.mxu0 0.0
    %530 = vmatpush2.msra.mxu0 0.0
    %531 = vmatprep.subr.mxu0 0.0
    %532 = vmatpush2.msra.mxu0 0.0
    %533 = vmatprep.subr.mxu0 0.0
    %534 = vmatpush2.msra.mxu0 0.0
    %535 = vmatprep.mubr.f32.mxu0 0.0
    %536 = vmatmul.mubr.f32.gmra.mxu0 %v466
    %v537 = vpop.f32.mrf.mxu0
    %v538 = vadd.f32 %v463, %v537
    %v539 = vpop.f32.mrf.mxu0
    %540 = vmatprep.mubr.f32.mxu0 0.0
    %541 = vmatmul.mubr.f32.gmra.mxu0 %v469
    %v542 = vpop.f32.mrf.mxu0
    %v543 = vadd.f32 %v463, %v542
    %v544 = vpop.f32.mrf.mxu0
    %545 = vdwg.mxu0
    %v546 = vxor.u32 %v538, 2147483648
    %v547 = vxor.u32 %v543, 2147483648
    %v548 = vmul.f32 %v546, 1.442695
    %v549 = vpow.pop %v548
    %v550 = vmul.f32 %v547, 1.442695
    %v551 = vpow.pop %v550
    %v552 = vadd.f32 %v549, 1.0
    %v553 = vadd.f32 %v551, 1.0
    %v554 = vrcp.pop %v552
    %v555 = vmul.f32 1.0, %v554
    %v556 = vrcp.pop %v553
    %v557 = vmul.f32 1.0, %v556
    %v558 = vmul.f32 %v352, %v149
    %v559 = vmul.f32 %v354, %v150
    %560 = vst.msk [vmem:[#allocation16] sm:$0xff] %vm162, %v558
    %561 = vst.msk [vmem:[#allocation16 + $0x8] sm:$0xff] %vm162, %v559
    %v562 = vmul.f32 %v555, %v147
    %v563 = vmul.f32 %v557, %v148
    %566 = vrot.lane.b32.xlu0 %v562, 32
    %v567 = vpop.permute.xlu0 %566
    %568 = vrot.lane.b32.xlu0 %v563, 32
    %v569 = vpop.permute.xlu0 %568
    %vm572 = vcmask 523520
    %573 = vst.msk [vmem:[#allocation16] sm:$0xff] %vm572, %v567
    %574 = vst.msk [vmem:[#allocation16 + $0x8] sm:$0xff] %vm572, %v569
    // Predicated region
    $region82: #{tpu_custom_call.1} parent=1 // pred_check
      _
    $region83: #{tpu_custom_call.1} parent=1 // pred_check_branch
      %576 = sbr.rel (0) target = $region85
    $region84: #{tpu_custom_call.1} parent=1 // pred_region
      %s578 = ssub.s32 256, 256
      %579 = vsyncadd [#allocation4], %s578
      %s580 = sshll.u32 [#allocation16], 4
      %s581 = int_to_ptr.vmem [resolvable:$true] %s580
      %586 = dma.vmem_to_hbm [thread:$0]  %s581, 256, %s12, [#allocation4], 128, 128, 8
    $region85: #{tpu_custom_call.1} parent=1 // pred_fallthru
      _
    // Predicated region
    $region86: #{tpu_custom_call.1} parent=1 // pred_check
      _
    $region87: #{tpu_custom_call.1} parent=1 // pred_check_branch
      %588 = sbr.rel (0) target = $region89
    $region88: #{tpu_custom_call.1} parent=1 // pred_region
      %589 = dma.done [#allocation4], 256
    $region89: #{tpu_custom_call.1} parent=1 // pred_fallthru
      _
    %590 = vsyncpa [#allocation3], 1
    %591 = vsyncpa [#allocation6], 1
    %592 = vsyncpa [#allocation9], 1
    %593 = vsyncpa [#allocation12], 1
    %594 = vsyncpa [#allocation15], 1
    %595 = vsyncpa [#allocation4], 1

</llo_original>
